<compile_context>
chip_gen: v7x
topology: tpu7x:2x2x1
jax: 0.10.0
libtpu: 0.0.40
codegen_flags: <defaults>
</compile_context>

<pallas_src>
import jax
import jax.numpy as jnp
from jax.experimental import pallas as pl
from jax.experimental.pallas import tpu as pltpu

HIDDEN_NODES = 50
IN_FEATURES = 28 * 28 * 3          # 2352
OUT_FEATURES = 10

HIDDEN_PAD = 128                   # lane-dense hidden dim
OUT_PAD = 128                      # lane-dense output dim


def _round_up(n, m):
    return ((n + m - 1) // m) * m


def _cdiv(a, b):
    return (a + b - 1) // b


def _tile_budget():
    """(max_row_tile, vmem_limit_bytes) per TPU generation (safe fallback)."""
    try:
        kind = jax.devices()[0].device_kind.lower()
    except Exception:
        kind = ""
    if ("v5" in kind) or ("v6" in kind):
        # 128 MiB VMEM parts: bigger tiles amortize per-step pipeline overhead.
        return 2048, 96 << 20
    # v7x (64 MiB VMEM) and unknown devices: conservative budget.
    return 1024, 48 << 20


def _choose_tiling(B, max_row_tile):
    """Balanced batch tiling (minimal padding), >=2 grid steps when splittable."""
    n_tiles = max(1, _cdiv(B, max_row_tile))
    if n_tiles == 1 and B > 8:
        # Ensure at least 2 grid steps so the "parallel" axis engages both
        # TensorCores on v7x; ~0.35 us extra per-step overhead is negligible.
        n_tiles = 2
    row_tile = _round_up(_cdiv(B, n_tiles), 8)
    b_pad = n_tiles * row_tile
    return row_tile, b_pad, n_tiles


def prepare_params(w1, b1, w2, b2):
    """One-time zero padding of the weights to lane-dense shapes.

    Zeros in the padded hidden/output columns keep the f32 math bit-exact.
    Call once at init and reuse the padded params for every forward pass.
    """
    w1_p = jnp.zeros((IN_FEATURES, HIDDEN_PAD), jnp.float32).at[:, :HIDDEN_NODES].set(w1)
    b1_p = jnp.zeros((1, HIDDEN_PAD), jnp.float32).at[:, :HIDDEN_NODES].set(b1)
    w2_p = jnp.zeros((HIDDEN_PAD, OUT_PAD), jnp.float32).at[:HIDDEN_NODES, :OUT_FEATURES].set(w2)
    b2_p = jnp.zeros((1, OUT_PAD), jnp.float32).at[:, :OUT_FEATURES].set(b2)
    return w1_p, b1_p, w2_p, b2_p


def mlp_kernel(x_ref, w1_ref, b1_ref, w2_ref, b2_ref, o_ref):
    # First linear layer: (T, D) @ (D, Hp) + (1, Hp)   [MXU, f32 accumulate]
    h = jnp.dot(x_ref[...], w1_ref[...],
                preferred_element_type=jnp.float32) + b1_ref[...]
    # Second linear layer (no nonlinearity in the reference module):
    # (T, Hp) @ (Hp, Op) + (1, Op)
    out = jnp.dot(h, w2_ref[...],
                  preferred_element_type=jnp.float32) + b2_ref[...]
    o_ref[...] = out.astype(o_ref.dtype)


def mlp_forward(x_nchw, w1_p, b1_p, w2_p, b2_p):
    """x_nchw: (B, 3, 28, 28) f32. Padded params from prepare_params().
    Returns (B, 10) f32, identical to torch: Linear(Linear(x.view(B,-1)))."""
    B = x_nchw.shape[0]
    # Flatten exactly like torch's x.view(B, -1) on contiguous NCHW.
    x_flat = x_nchw.reshape(B, -1).astype(jnp.float32)

    max_row_tile, vmem_limit = _tile_budget()
    row_tile, b_pad, _ = _choose_tiling(B, max_row_tile)
    if b_pad != B:
        x_flat = jnp.pad(x_flat, ((0, b_pad - B), (0, 0)))
    grid = (b_pad // row_tile,)

    out_padded = pl.pallas_call(
        mlp_kernel,
        out_shape=jax.ShapeDtypeStruct((b_pad, OUT_PAD), jnp.float32),
        grid=grid,
        in_specs=[
            # x: one batch tile per grid step (double-buffered by the pipeline)
            pl.BlockSpec((row_tile, IN_FEATURES), lambda i: (i, 0)),
            # weights / biases: constant index_map -> stay resident in VMEM
            pl.BlockSpec((IN_FEATURES, HIDDEN_PAD), lambda i: (0, 0)),
            pl.BlockSpec((1, HIDDEN_PAD), lambda i: (0, 0)),
            pl.BlockSpec((HIDDEN_PAD, OUT_PAD), lambda i: (0, 0)),
            pl.BlockSpec((1, OUT_PAD), lambda i: (0, 0)),
        ],
        out_specs=pl.BlockSpec((row_tile, OUT_PAD), lambda i: (i, 0)),
        compiler_params=pltpu.CompilerParams(
            dimension_semantics=("parallel",),   # megacore / 2 TCs on v7x
            vmem_limit_bytes=vmem_limit,
        ),
    )(x_flat, w1_p, b1_p, w2_p, b2_p)

    # Slice back to the logical (B, 10) result (downstream consumers may
    # instead keep the padded (b_pad, 128) block to save this copy).
    return out_padded[:B, :OUT_FEATURES]


def init_params(key):
    """Deterministic synthetic init mirroring nn.Linear shapes.

    PyTorch stores Linear weight as (out, in); we keep the transposed
    (in, out) layout for the kernel's matmuls.
    """
    k1, k2, k3, k4 = jax.random.split(key, 4)
    bound1 = 1.0 / jnp.sqrt(IN_FEATURES)
    bound2 = 1.0 / jnp.sqrt(HIDDEN_NODES)
    w1 = jax.random.uniform(k1, (IN_FEATURES, HIDDEN_NODES),
                            jnp.float32, -bound1, bound1)
    b1 = jax.random.uniform(k2, (1, HIDDEN_NODES),
                            jnp.float32, -bound1, bound1)
    w2 = jax.random.uniform(k3, (HIDDEN_NODES, OUT_FEATURES),
                            jnp.float32, -bound2, bound2)
    b2 = jax.random.uniform(k4, (1, OUT_FEATURES),
                            jnp.float32, -bound2, bound2)
    return w1, b1, w2, b2


if __name__ == "__main__":
    key = jax.random.PRNGKey(0)
    kx, kp = jax.random.split(key)

    B = 2
    x = jax.random.normal(kx, (B, 3, 28, 28), dtype=jnp.float32)
    w1, b1, w2, b2 = init_params(kp)

    # One-time padded params (hoisted out of the forward path).
    padded = prepare_params(w1, b1, w2, b2)
    padded = jax.block_until_ready(padded)

    fwd = jax.jit(mlp_forward)
    out = fwd(x, *padded)
    out = jax.block_until_ready(out)

    # Sanity check against plain-JAX reference (f32, two matmuls).
    ref = (x.reshape(B, -1) @ w1 + b1) @ w2 + b2
    assert out.shape == (B, OUT_FEATURES)
    assert jnp.allclose(out, ref, atol=1e-4, rtol=1e-4)

    print("KERNEL_OK")
</pallas_src>

<mosaic_0001>
module attributes {stable_mosaic.version = 11 : i64} {
  func.func @mlp_kernel(%arg0: i32, %arg1: memref<8x2352xf32, #tpu.memory_space<vmem>>, %arg2: memref<2352x128xf32, #tpu.memory_space<vmem>>, %arg3: memref<1x128xf32, #tpu.memory_space<vmem>>, %arg4: memref<128x128xf32, #tpu.memory_space<vmem>>, %arg5: memref<1x128xf32, #tpu.memory_space<vmem>>, %arg6: memref<8x128xf32, #tpu.memory_space<vmem>>) attributes {dimension_semantics = [#tpu.dimension_semantics<parallel>], iteration_bounds = array<i64: 1>, scalar_prefetch = 0 : i64, scratch_operands = 0 : i64, tpu.core_type = #tpu.core_type<tc>, window_params = [{transform_indices = @transform_0, window_bounds = array<i64: 8, 2352>}, {pipeline_mode = #tpu.pipeline_mode<synchronous>, transform_indices = @transform_1, window_bounds = array<i64: 2352, 128>}, {pipeline_mode = #tpu.pipeline_mode<synchronous>, transform_indices = @transform_2, window_bounds = array<i64: 1, 128>}, {pipeline_mode = #tpu.pipeline_mode<synchronous>, transform_indices = @transform_3, window_bounds = array<i64: 128, 128>}, {pipeline_mode = #tpu.pipeline_mode<synchronous>, transform_indices = @transform_4, window_bounds = array<i64: 1, 128>}, {transform_indices = @transform_5, window_bounds = array<i64: 8, 128>}]} {
    %c0 = arith.constant 0 : index
    %c0_0 = arith.constant 0 : index
    %0 = vector.load %arg1[%c0, %c0_0] : memref<8x2352xf32, #tpu.memory_space<vmem>>, vector<8x2352xf32>
    %c0_1 = arith.constant 0 : index
    %c0_2 = arith.constant 0 : index
    %1 = vector.load %arg2[%c0_1, %c0_2] : memref<2352x128xf32, #tpu.memory_space<vmem>>, vector<2352x128xf32>
    %cst = arith.constant dense<0.000000e+00> : vector<8x128xf32>
    %2 = tpu.matmul %0, %1, %cst {dimension_numbers = #tpu.dot_dimension_numbers<[1], [0], [0], [1], [0, 0, 1, 1], [], []>} : vector<8x2352xf32>, vector<2352x128xf32>, vector<8x128xf32> -> vector<8x128xf32>
    %c0_3 = arith.constant 0 : index
    %c0_4 = arith.constant 0 : index
    %3 = vector.load %arg3[%c0_3, %c0_4] : memref<1x128xf32, #tpu.memory_space<vmem>>, vector<1x128xf32>
    %4 = vector.broadcast %3 : vector<1x128xf32> to vector<8x128xf32>
    %5 = arith.addf %2, %4 : vector<8x128xf32>
    %c0_5 = arith.constant 0 : index
    %c0_6 = arith.constant 0 : index
    %6 = vector.load %arg4[%c0_5, %c0_6] : memref<128x128xf32, #tpu.memory_space<vmem>>, vector<128x128xf32>
    %cst_7 = arith.constant dense<0.000000e+00> : vector<8x128xf32>
    %7 = tpu.matmul %5, %6, %cst_7 {dimension_numbers = #tpu.dot_dimension_numbers<[1], [0], [0], [1], [0, 0, 1, 1], [], []>} : vector<8x128xf32>, vector<128x128xf32>, vector<8x128xf32> -> vector<8x128xf32>
    %c0_8 = arith.constant 0 : index
    %c0_9 = arith.constant 0 : index
    %8 = vector.load %arg5[%c0_8, %c0_9] : memref<1x128xf32, #tpu.memory_space<vmem>>, vector<1x128xf32>
    %9 = vector.broadcast %8 : vector<1x128xf32> to vector<8x128xf32>
    %10 = arith.addf %7, %9 : vector<8x128xf32>
    %c0_10 = arith.constant 0 : index
    %c0_11 = arith.constant 0 : index
    %11 = vector.load %arg6[%c0_10, %c0_11] : memref<8x128xf32, #tpu.memory_space<vmem>>, vector<8x128xf32>
    tpu.vector_store %arg6[%c0_10, %c0_11], %10 {strides = array<i32>} : memref<8x128xf32, #tpu.memory_space<vmem>>, vector<8x128xf32>,
    return
  }
  func.func @transform_0(%arg0: i32) -> (i32, i32) {
    %c0_i32 = arith.constant 0 : i32
    %c0_i32_0 = arith.constant 0 : i32
    return %arg0, %c0_i32 : i32, i32
  }
  func.func @transform_1(%arg0: i32) -> (i32, i32) {
    %c0_i32 = arith.constant 0 : i32
    %c0_i32_0 = arith.constant 0 : i32
    %c0_i32_1 = arith.constant 0 : i32
    return %c0_i32, %c0_i32_0 : i32, i32
  }
  func.func @transform_2(%arg0: i32) -> (i32, i32) {
    %c0_i32 = arith.constant 0 : i32
    %c0_i32_0 = arith.constant 0 : i32
    %c0_i32_1 = arith.constant 0 : i32
    return %c0_i32, %c0_i32_0 : i32, i32
  }
  func.func @transform_3(%arg0: i32) -> (i32, i32) {
    %c0_i32 = arith.constant 0 : i32
    %c0_i32_0 = arith.constant 0 : i32
    %c0_i32_1 = arith.constant 0 : i32
    return %c0_i32, %c0_i32_0 : i32, i32
  }
  func.func @transform_4(%arg0: i32) -> (i32, i32) {
    %c0_i32 = arith.constant 0 : i32
    %c0_i32_0 = arith.constant 0 : i32
    %c0_i32_1 = arith.constant 0 : i32
    return %c0_i32, %c0_i32_0 : i32, i32
  }
  func.func @transform_5(%arg0: i32) -> (i32, i32) {
    %c0_i32 = arith.constant 0 : i32
    %c0_i32_0 = arith.constant 0 : i32
    return %arg0, %c0_i32 : i32, i32
  }
}

</mosaic_0001>

<llo_original>
// kernel: mlp_forward.1
$region0: #{mlp_forward.1}
  #allocation0 [shape = 'u32[]', space=smem, size = 0x4, offset = 0x4, fixed_abs, tag = 'smem constant byte address 0x4 - core index']
  #allocation1 [shape = 'u32[144,128]{1,0:T(1,128)}', space=vmem, size = 0x12000, scoped, tag = 'internal scratch']
  %s0 = inlined_call_operand.vmem [shape: f32[8,2352], index: 0, kind: input, shape index: {}]
  %s1 = inlined_call_operand.hbm [shape: f32[2352,128], index: 1, kind: input, shape index: {}]
  %s2 = inlined_call_operand.hbm [shape: f32[1,128], index: 2, kind: input, shape index: {}]
  %s3 = inlined_call_operand.hbm [shape: f32[128,128], index: 3, kind: input, shape index: {}]
  %s4 = inlined_call_operand.hbm [shape: f32[1,128], index: 4, kind: input, shape index: {}]
  %s5 = inlined_call_operand.vmem [shape: f32[8,128], index: 5, kind: output, shape index: {}]
  %s6 = sld [smem:[#allocation0]]
  $region46: #{mlp_forward.1} parent=0
    _
  %s8 = ssub.s32 1, %s6
  %s9 = scalar_select 0, %s8, %s6
  $region1: #{mlp_forward.1} parent=0
    #allocation2 [shape = 'u8[1204224]{0}', space=vmem, size = 0x126000, scoped, tag = 'input window, operand 1, single buffered']
    #allocation3 [shape = 's32[1]{0}', space=sflag, size = 0x4, scoped, tag = 'scoped memory for mlp_forward.1']
    #allocation4 [shape = 'u8[512]{0}', space=vmem, size = 0x400, scoped, tag = 'input window, operand 2, single buffered']
    #allocation5 [shape = 's32[1]{0}', space=sflag, size = 0x4, scoped, tag = 'scoped memory for mlp_forward.1']
    #allocation6 [shape = 'u8[65536]{0}', space=vmem, size = 0x10000, scoped, tag = 'input window, operand 3, single buffered']
    #allocation7 [shape = 'u8[512]{0}', space=vmem, size = 0x400, scoped, tag = 'input window, operand 4, single buffered']
    #allocation8 [shape = 's32[1]{0}', space=sflag, size = 0x4, scoped, tag = 'scoped memory for mlp_forward.1']
    %10 = vsyncpa [#allocation3], 0
    %11 = vsyncpa [#allocation5], 0
    %12 = vsyncpa [#allocation8], 0
    // Predicated region
    $region2: #{mlp_forward.1} parent=1 // pred_check
      _
    $region3: #{mlp_forward.1} parent=1 // pred_check_branch
      %14 = sbr.rel (0) target = $region5
    $region4: #{mlp_forward.1} parent=1 // pred_region
      _
    $region5: #{mlp_forward.1} parent=1 // pred_fallthru
      _
    // Predicated region
    $region6: #{mlp_forward.1} parent=1 // pred_check
      _
    $region7: #{mlp_forward.1} parent=1 // pred_check_branch
      %16 = sbr.rel (0) target = $region9
    $region8: #{mlp_forward.1} parent=1 // pred_region
      %s18 = ssub.s32 37632, 37632
      %19 = vsyncadd [#allocation3], %s18
      %s20 = sshll.u32 [#allocation2], 4
      %s21 = int_to_ptr.vmem [resolvable:$true] %s20
      %26 = dma.hbm_to_vmem [thread:$0]  %s1, 37632, %s21, [#allocation3], 128, 128, 8
    $region9: #{mlp_forward.1} parent=1 // pred_fallthru
      _
    // Predicated region
    $region10: #{mlp_forward.1} parent=1 // pred_check
      _
    $region11: #{mlp_forward.1} parent=1 // pred_check_branch
      %28 = sbr.rel (0) target = $region13
    $region12: #{mlp_forward.1} parent=1 // pred_region
      %s30 = ssub.s32 16, 16
      %31 = vsyncadd [#allocation5], %s30
      %s33 = sshll.u32 [#allocation4], 4
      %s34 = int_to_ptr.vmem [resolvable:$true] %s33
      %36 = dma.hbm_to_vmem [thread:$0]  %s2, 16, %s34, [#allocation5]
    $region13: #{mlp_forward.1} parent=1 // pred_fallthru
      _
    // Predicated region
    $region14: #{mlp_forward.1} parent=1 // pred_check
      _
    $region15: #{mlp_forward.1} parent=1 // pred_check_branch
      %38 = sbr.rel (0) target = $region17
    $region16: #{mlp_forward.1} parent=1 // pred_region
      %s40 = ssub.s32 2048, 2048
      %41 = vsyncadd [#allocation5], %s40
      %s42 = sshll.u32 [#allocation6], 4
      %s43 = int_to_ptr.vmem [resolvable:$true] %s42
      %48 = dma.hbm_to_vmem [thread:$0]  %s3, 2048, %s43, [#allocation5], 128, 128, 8
    $region17: #{mlp_forward.1} parent=1 // pred_fallthru
      _
    // Predicated region
    $region18: #{mlp_forward.1} parent=1 // pred_check
      _
    $region19: #{mlp_forward.1} parent=1 // pred_check_branch
      %50 = sbr.rel (0) target = $region21
    $region20: #{mlp_forward.1} parent=1 // pred_region
      %s52 = ssub.s32 16, 16
      %53 = vsyncadd [#allocation8], %s52
      %s55 = sshll.u32 [#allocation7], 4
      %s56 = int_to_ptr.vmem [resolvable:$true] %s55
      %58 = dma.hbm_to_vmem [thread:$0]  %s4, 16, %s56, [#allocation8]
    $region21: #{mlp_forward.1} parent=1 // pred_fallthru
      _
    // Predicated region
    $region22: #{mlp_forward.1} parent=1 // pred_check
      _
    $region23: #{mlp_forward.1} parent=1 // pred_check_branch
      %60 = sbr.rel (0) target = $region25
    $region24: #{mlp_forward.1} parent=1 // pred_region
      %61 = dma.done [#allocation3], 37632
    $region25: #{mlp_forward.1} parent=1 // pred_fallthru
      _
    // Predicated region
    $region26: #{mlp_forward.1} parent=1 // pred_check
      _
    $region27: #{mlp_forward.1} parent=1 // pred_check_branch
      %63 = sbr.rel (0) target = $region29
    $region28: #{mlp_forward.1} parent=1 // pred_region
      %64 = dma.done [#allocation5], 16
    $region29: #{mlp_forward.1} parent=1 // pred_fallthru
      _
    // Predicated region
    $region30: #{mlp_forward.1} parent=1 // pred_check
      _
    $region31: #{mlp_forward.1} parent=1 // pred_check_branch
      %66 = sbr.rel (0) target = $region33
    $region32: #{mlp_forward.1} parent=1 // pred_region
      %67 = dma.done [#allocation5], 2048
    $region33: #{mlp_forward.1} parent=1 // pred_fallthru
      _
    // Predicated region
    $region34: #{mlp_forward.1} parent=1 // pred_check
      _
    $region35: #{mlp_forward.1} parent=1 // pred_check_branch
      %69 = sbr.rel (0) target = $region37
    $region36: #{mlp_forward.1} parent=1 // pred_region
      %70 = dma.done [#allocation8], 16
    $region37: #{mlp_forward.1} parent=1 // pred_fallthru
      _
    %v71 = vld [vmem:[%s0] sm:$0xff]
    %v72 = vld [vmem:[%s0 + $0x8] sm:$0xff]
    %v73 = vld [vmem:[%s0 + $0x10] sm:$0xff]
    %v74 = vld [vmem:[%s0 + $0x18] sm:$0xff]
    %v75 = vld [vmem:[%s0 + $0x20] sm:$0xff]
    %v76 = vld [vmem:[%s0 + $0x28] sm:$0xff]
    %v77 = vld [vmem:[%s0 + $0x30] sm:$0xff]
    %v78 = vld [vmem:[%s0 + $0x38] sm:$0xff]
    %v79 = vld [vmem:[%s0 + $0x40] sm:$0xff]
    %v80 = vld [vmem:[%s0 + $0x48] sm:$0xff]
    %v81 = vld [vmem:[%s0 + $0x50] sm:$0xff]
    %v82 = vld [vmem:[%s0 + $0x58] sm:$0xff]
    %v83 = vld [vmem:[%s0 + $0x60] sm:$0xff]
    %v84 = vld [vmem:[%s0 + $0x68] sm:$0xff]
    %v85 = vld [vmem:[%s0 + $0x70] sm:$0xff]
    %v86 = vld [vmem:[%s0 + $0x78] sm:$0xff]
    %v87 = vld [vmem:[%s0 + $0x80] sm:$0xff]
    %v88 = vld [vmem:[%s0 + $0x88] sm:$0xff]
    %v89 = vld [vmem:[%s0 + $0x90] sm:$0xff]
    %v90 = vld [vmem:[#allocation2] sm:$0xff]
    %v91 = vld [vmem:[#allocation2 + $0x8] sm:$0xff]
    %v92 = vld [vmem:[#allocation2 + $0x10] sm:$0xff]
    %v93 = vld [vmem:[#allocation2 + $0x18] sm:$0xff]
    %v94 = vld [vmem:[#allocation2 + $0x20] sm:$0xff]
    %v95 = vld [vmem:[#allocation2 + $0x28] sm:$0xff]
    %v96 = vld [vmem:[#allocation2 + $0x30] sm:$0xff]
    %v97 = vld [vmem:[#allocation2 + $0x38] sm:$0xff]
    %v98 = vld [vmem:[#allocation2 + $0x40] sm:$0xff]
    %v99 = vld [vmem:[#allocation2 + $0x48] sm:$0xff]
    %v100 = vld [vmem:[#allocation2 + $0x50] sm:$0xff]
    %v101 = vld [vmem:[#allocation2 + $0x58] sm:$0xff]
    %v102 = vld [vmem:[#allocation2 + $0x60] sm:$0xff]
    %v103 = vld [vmem:[#allocation2 + $0x68] sm:$0xff]
    %v104 = vld [vmem:[#allocation2 + $0x70] sm:$0xff]
    %v105 = vld [vmem:[#allocation2 + $0x78] sm:$0xff]
    %v106 = vld [vmem:[#allocation2 + $0x80] sm:$0xff]
    %v107 = vld [vmem:[#allocation2 + $0x88] sm:$0xff]
    %v108 = vld [vmem:[#allocation2 + $0x90] sm:$0xff]
    %v109 = vld [vmem:[#allocation2 + $0x98] sm:$0xff]
    %v110 = vld [vmem:[#allocation2 + $0xa0] sm:$0xff]
    %v111 = vld [vmem:[#allocation2 + $0xa8] sm:$0xff]
    %v112 = vld [vmem:[#allocation2 + $0xb0] sm:$0xff]
    %v113 = vld [vmem:[#allocation2 + $0xb8] sm:$0xff]
    %v114 = vld [vmem:[#allocation2 + $0xc0] sm:$0xff]
    %v115 = vld [vmem:[#allocation2 + $0xc8] sm:$0xff]
    %v116 = vld [vmem:[#allocation2 + $0xd0] sm:$0xff]
    %v117 = vld [vmem:[#allocation2 + $0xd8] sm:$0xff]
    %v118 = vld [vmem:[#allocation2 + $0xe0] sm:$0xff]
    %v119 = vld [vmem:[#allocation2 + $0xe8] sm:$0xff]
    %v120 = vld [vmem:[#allocation2 + $0xf0] sm:$0xff]
    %v121 = vld [vmem:[#allocation2 + $0xf8] sm:$0xff]
    %v122 = vld [vmem:[#allocation2 + $0x100] sm:$0xff]
    %v123 = vld [vmem:[#allocation2 + $0x108] sm:$0xff]
    %v124 = vld [vmem:[#allocation2 + $0x110] sm:$0xff]
    %v125 = vld [vmem:[#allocation2 + $0x118] sm:$0xff]
    %v126 = vld [vmem:[#allocation2 + $0x120] sm:$0xff]
    %v127 = vld [vmem:[#allocation2 + $0x128] sm:$0xff]
    %v128 = vld [vmem:[#allocation2 + $0x130] sm:$0xff]
    %v129 = vld [vmem:[#allocation2 + $0x138] sm:$0xff]
    %v130 = vld [vmem:[#allocation2 + $0x140] sm:$0xff]
    %v131 = vld [vmem:[#allocation2 + $0x148] sm:$0xff]
    %v132 = vld [vmem:[#allocation2 + $0x150] sm:$0xff]
    %v133 = vld [vmem:[#allocation2 + $0x158] sm:$0xff]
    %v134 = vld [vmem:[#allocation2 + $0x160] sm:$0xff]
    %v135 = vld [vmem:[#allocation2 + $0x168] sm:$0xff]
    %v136 = vld [vmem:[#allocation2 + $0x170] sm:$0xff]
    %v137 = vld [vmem:[#allocation2 + $0x178] sm:$0xff]
    %v138 = vld [vmem:[#allocation2 + $0x180] sm:$0xff]
    %v139 = vld [vmem:[#allocation2 + $0x188] sm:$0xff]
    %v140 = vld [vmem:[#allocation2 + $0x190] sm:$0xff]
    %v141 = vld [vmem:[#allocation2 + $0x198] sm:$0xff]
    %v142 = vld [vmem:[#allocation2 + $0x1a0] sm:$0xff]
    %v143 = vld [vmem:[#allocation2 + $0x1a8] sm:$0xff]
    %v144 = vld [vmem:[#allocation2 + $0x1b0] sm:$0xff]
    %v145 = vld [vmem:[#allocation2 + $0x1b8] sm:$0xff]
    %v146 = vld [vmem:[#allocation2 + $0x1c0] sm:$0xff]
    %v147 = vld [vmem:[#allocation2 + $0x1c8] sm:$0xff]
    %v148 = vld [vmem:[#allocation2 + $0x1d0] sm:$0xff]
    %v149 = vld [vmem:[#allocation2 + $0x1d8] sm:$0xff]
    %v150 = vld [vmem:[#allocation2 + $0x1e0] sm:$0xff]
    %v151 = vld [vmem:[#allocation2 + $0x1e8] sm:$0xff]
    %v152 = vld [vmem:[#allocation2 + $0x1f0] sm:$0xff]
    %v153 = vld [vmem:[#allocation2 + $0x1f8] sm:$0xff]
    %v154 = vld [vmem:[#allocation2 + $0x200] sm:$0xff]
    %v155 = vld [vmem:[#allocation2 + $0x208] sm:$0xff]
    %v156 = vld [vmem:[#allocation2 + $0x210] sm:$0xff]
    %v157 = vld [vmem:[#allocation2 + $0x218] sm:$0xff]
    %v158 = vld [vmem:[#allocation2 + $0x220] sm:$0xff]
    %v159 = vld [vmem:[#allocation2 + $0x228] sm:$0xff]
    %v160 = vld [vmem:[#allocation2 + $0x230] sm:$0xff]
    %v161 = vld [vmem:[#allocation2 + $0x238] sm:$0xff]
    %v162 = vld [vmem:[#allocation2 + $0x240] sm:$0xff]
    %v163 = vld [vmem:[#allocation2 + $0x248] sm:$0xff]
    %v164 = vld [vmem:[#allocation2 + $0x250] sm:$0xff]
    %v165 = vld [vmem:[#allocation2 + $0x258] sm:$0xff]
    %v166 = vld [vmem:[#allocation2 + $0x260] sm:$0xff]
    %v167 = vld [vmem:[#allocation2 + $0x268] sm:$0xff]
    %v168 = vld [vmem:[#allocation2 + $0x270] sm:$0xff]
    %v169 = vld [vmem:[#allocation2 + $0x278] sm:$0xff]
    %v170 = vld [vmem:[#allocation2 + $0x280] sm:$0xff]
    %v171 = vld [vmem:[#allocation2 + $0x288] sm:$0xff]
    %v172 = vld [vmem:[#allocation2 + $0x290] sm:$0xff]
    %v173 = vld [vmem:[#allocation2 + $0x298] sm:$0xff]
    %v174 = vld [vmem:[#allocation2 + $0x2a0] sm:$0xff]
    %v175 = vld [vmem:[#allocation2 + $0x2a8] sm:$0xff]
    %v176 = vld [vmem:[#allocation2 + $0x2b0] sm:$0xff]
    %v177 = vld [vmem:[#allocation2 + $0x2b8] sm:$0xff]
    %v178 = vld [vmem:[#allocation2 + $0x2c0] sm:$0xff]
    %v179 = vld [vmem:[#allocation2 + $0x2c8] sm:$0xff]
    %v180 = vld [vmem:[#allocation2 + $0x2d0] sm:$0xff]
    %v181 = vld [vmem:[#allocation2 + $0x2d8] sm:$0xff]
    %v182 = vld [vmem:[#allocation2 + $0x2e0] sm:$0xff]
    %v183 = vld [vmem:[#allocation2 + $0x2e8] sm:$0xff]
    %v184 = vld [vmem:[#allocation2 + $0x2f0] sm:$0xff]
    %v185 = vld [vmem:[#allocation2 + $0x2f8] sm:$0xff]
    %v186 = vld [vmem:[#allocation2 + $0x300] sm:$0xff]
    %v187 = vld [vmem:[#allocation2 + $0x308] sm:$0xff]
    %v188 = vld [vmem:[#allocation2 + $0x310] sm:$0xff]
    %v189 = vld [vmem:[#allocation2 + $0x318] sm:$0xff]
    %v190 = vld [vmem:[#allocation2 + $0x320] sm:$0xff]
    %v191 = vld [vmem:[#allocation2 + $0x328] sm:$0xff]
    %v192 = vld [vmem:[#allocation2 + $0x330] sm:$0xff]
    %v193 = vld [vmem:[#allocation2 + $0x338] sm:$0xff]
    %v194 = vld [vmem:[#allocation2 + $0x340] sm:$0xff]
    %v195 = vld [vmem:[#allocation2 + $0x348] sm:$0xff]
    %v196 = vld [vmem:[#allocation2 + $0x350] sm:$0xff]
    %v197 = vld [vmem:[#allocation2 + $0x358] sm:$0xff]
    %v198 = vld [vmem:[#allocation2 + $0x360] sm:$0xff]
    %v199 = vld [vmem:[#allocation2 + $0x368] sm:$0xff]
    %v200 = vld [vmem:[#allocation2 + $0x370] sm:$0xff]
    %v201 = vld [vmem:[#allocation2 + $0x378] sm:$0xff]
    %v202 = vld [vmem:[#allocation2 + $0x380] sm:$0xff]
    %v203 = vld [vmem:[#allocation2 + $0x388] sm:$0xff]
    %v204 = vld [vmem:[#allocation2 + $0x390] sm:$0xff]
    %v205 = vld [vmem:[#allocation2 + $0x398] sm:$0xff]
    %v206 = vld [vmem:[#allocation2 + $0x3a0] sm:$0xff]
    %v207 = vld [vmem:[#allocation2 + $0x3a8] sm:$0xff]
    %v208 = vld [vmem:[#allocation2 + $0x3b0] sm:$0xff]
    %v209 = vld [vmem:[#allocation2 + $0x3b8] sm:$0xff]
    %v210 = vld [vmem:[#allocation2 + $0x3c0] sm:$0xff]
    %v211 = vld [vmem:[#allocation2 + $0x3c8] sm:$0xff]
    %v212 = vld [vmem:[#allocation2 + $0x3d0] sm:$0xff]
    %v213 = vld [vmem:[#allocation2 + $0x3d8] sm:$0xff]
    %v214 = vld [vmem:[#allocation2 + $0x3e0] sm:$0xff]
    %v215 = vld [vmem:[#allocation2 + $0x3e8] sm:$0xff]
    %v216 = vld [vmem:[#allocation2 + $0x3f0] sm:$0xff]
    %v217 = vld [vmem:[#allocation2 + $0x3f8] sm:$0xff]
    %v218 = vld [vmem:[#allocation2 + $0x400] sm:$0xff]
    %v219 = vld [vmem:[#allocation2 + $0x408] sm:$0xff]
    %v220 = vld [vmem:[#allocation2 + $0x410] sm:$0xff]
    %v221 = vld [vmem:[#allocation2 + $0x418] sm:$0xff]
    %v222 = vld [vmem:[#allocation2 + $0x420] sm:$0xff]
    %v223 = vld [vmem:[#allocation2 + $0x428] sm:$0xff]
    %v224 = vld [vmem:[#allocation2 + $0x430] sm:$0xff]
    %v225 = vld [vmem:[#allocation2 + $0x438] sm:$0xff]
    %v226 = vld [vmem:[#allocation2 + $0x440] sm:$0xff]
    %v227 = vld [vmem:[#allocation2 + $0x448] sm:$0xff]
    %v228 = vld [vmem:[#allocation2 + $0x450] sm:$0xff]
    %v229 = vld [vmem:[#allocation2 + $0x458] sm:$0xff]
    %v230 = vld [vmem:[#allocation2 + $0x460] sm:$0xff]
    %v231 = vld [vmem:[#allocation2 + $0x468] sm:$0xff]
    %v232 = vld [vmem:[#allocation2 + $0x470] sm:$0xff]
    %v233 = vld [vmem:[#allocation2 + $0x478] sm:$0xff]
    %v234 = vld [vmem:[#allocation2 + $0x480] sm:$0xff]
    %v235 = vld [vmem:[#allocation2 + $0x488] sm:$0xff]
    %v236 = vld [vmem:[#allocation2 + $0x490] sm:$0xff]
    %v237 = vld [vmem:[#allocation2 + $0x498] sm:$0xff]
    %v238 = vld [vmem:[#allocation2 + $0x4a0] sm:$0xff]
    %v239 = vld [vmem:[#allocation2 + $0x4a8] sm:$0xff]
    %v240 = vld [vmem:[#allocation2 + $0x4b0] sm:$0xff]
    %v241 = vld [vmem:[#allocation2 + $0x4b8] sm:$0xff]
    %v242 = vld [vmem:[#allocation2 + $0x4c0] sm:$0xff]
    %v243 = vld [vmem:[#allocation2 + $0x4c8] sm:$0xff]
    %v244 = vld [vmem:[#allocation2 + $0x4d0] sm:$0xff]
    %v245 = vld [vmem:[#allocation2 + $0x4d8] sm:$0xff]
    %v246 = vld [vmem:[#allocation2 + $0x4e0] sm:$0xff]
    %v247 = vld [vmem:[#allocation2 + $0x4e8] sm:$0xff]
    %v248 = vld [vmem:[#allocation2 + $0x4f0] sm:$0xff]
    %v249 = vld [vmem:[#allocation2 + $0x4f8] sm:$0xff]
    %v250 = vld [vmem:[#allocation2 + $0x500] sm:$0xff]
    %v251 = vld [vmem:[#allocation2 + $0x508] sm:$0xff]
    %v252 = vld [vmem:[#allocation2 + $0x510] sm:$0xff]
    %v253 = vld [vmem:[#allocation2 + $0x518] sm:$0xff]
    %v254 = vld [vmem:[#allocation2 + $0x520] sm:$0xff]
    %v255 = vld [vmem:[#allocation2 + $0x528] sm:$0xff]
    %v256 = vld [vmem:[#allocation2 + $0x530] sm:$0xff]
    %v257 = vld [vmem:[#allocation2 + $0x538] sm:$0xff]
    %v258 = vld [vmem:[#allocation2 + $0x540] sm:$0xff]
    %v259 = vld [vmem:[#allocation2 + $0x548] sm:$0xff]
    %v260 = vld [vmem:[#allocation2 + $0x550] sm:$0xff]
    %v261 = vld [vmem:[#allocation2 + $0x558] sm:$0xff]
    %v262 = vld [vmem:[#allocation2 + $0x560] sm:$0xff]
    %v263 = vld [vmem:[#allocation2 + $0x568] sm:$0xff]
    %v264 = vld [vmem:[#allocation2 + $0x570] sm:$0xff]
    %v265 = vld [vmem:[#allocation2 + $0x578] sm:$0xff]
    %v266 = vld [vmem:[#allocation2 + $0x580] sm:$0xff]
    %v267 = vld [vmem:[#allocation2 + $0x588] sm:$0xff]
    %v268 = vld [vmem:[#allocation2 + $0x590] sm:$0xff]
    %v269 = vld [vmem:[#allocation2 + $0x598] sm:$0xff]
    %v270 = vld [vmem:[#allocation2 + $0x5a0] sm:$0xff]
    %v271 = vld [vmem:[#allocation2 + $0x5a8] sm:$0xff]
    %v272 = vld [vmem:[#allocation2 + $0x5b0] sm:$0xff]
    %v273 = vld [vmem:[#allocation2 + $0x5b8] sm:$0xff]
    %v274 = vld [vmem:[#allocation2 + $0x5c0] sm:$0xff]
    %v275 = vld [vmem:[#allocation2 + $0x5c8] sm:$0xff]
    %v276 = vld [vmem:[#allocation2 + $0x5d0] sm:$0xff]
    %v277 = vld [vmem:[#allocation2 + $0x5d8] sm:$0xff]
    %v278 = vld [vmem:[#allocation2 + $0x5e0] sm:$0xff]
    %v279 = vld [vmem:[#allocation2 + $0x5e8] sm:$0xff]
    %v280 = vld [vmem:[#allocation2 + $0x5f0] sm:$0xff]
    %v281 = vld [vmem:[#allocation2 + $0x5f8] sm:$0xff]
    %v282 = vld [vmem:[#allocation2 + $0x600] sm:$0xff]
    %v283 = vld [vmem:[#allocation2 + $0x608] sm:$0xff]
    %v284 = vld [vmem:[#allocation2 + $0x610] sm:$0xff]
    %v285 = vld [vmem:[#allocation2 + $0x618] sm:$0xff]
    %v286 = vld [vmem:[#allocation2 + $0x620] sm:$0xff]
    %v287 = vld [vmem:[#allocation2 + $0x628] sm:$0xff]
    %v288 = vld [vmem:[#allocation2 + $0x630] sm:$0xff]
    %v289 = vld [vmem:[#allocation2 + $0x638] sm:$0xff]
    %v290 = vld [vmem:[#allocation2 + $0x640] sm:$0xff]
    %v291 = vld [vmem:[#allocation2 + $0x648] sm:$0xff]
    %v292 = vld [vmem:[#allocation2 + $0x650] sm:$0xff]
    %v293 = vld [vmem:[#allocation2 + $0x658] sm:$0xff]
    %v294 = vld [vmem:[#allocation2 + $0x660] sm:$0xff]
    %v295 = vld [vmem:[#allocation2 + $0x668] sm:$0xff]
    %v296 = vld [vmem:[#allocation2 + $0x670] sm:$0xff]
    %v297 = vld [vmem:[#allocation2 + $0x678] sm:$0xff]
    %v298 = vld [vmem:[#allocation2 + $0x680] sm:$0xff]
    %v299 = vld [vmem:[#allocation2 + $0x688] sm:$0xff]
    %v300 = vld [vmem:[#allocation2 + $0x690] sm:$0xff]
    %v301 = vld [vmem:[#allocation2 + $0x698] sm:$0xff]
    %v302 = vld [vmem:[#allocation2 + $0x6a0] sm:$0xff]
    %v303 = vld [vmem:[#allocation2 + $0x6a8] sm:$0xff]
    %v304 = vld [vmem:[#allocation2 + $0x6b0] sm:$0xff]
    %v305 = vld [vmem:[#allocation2 + $0x6b8] sm:$0xff]
    %v306 = vld [vmem:[#allocation2 + $0x6c0] sm:$0xff]
    %v307 = vld [vmem:[#allocation2 + $0x6c8] sm:$0xff]
    %v308 = vld [vmem:[#allocation2 + $0x6d0] sm:$0xff]
    %v309 = vld [vmem:[#allocation2 + $0x6d8] sm:$0xff]
    %v310 = vld [vmem:[#allocation2 + $0x6e0] sm:$0xff]
    %v311 = vld [vmem:[#allocation2 + $0x6e8] sm:$0xff]
    %v312 = vld [vmem:[#allocation2 + $0x6f0] sm:$0xff]
    %v313 = vld [vmem:[#allocation2 + $0x6f8] sm:$0xff]
    %v314 = vld [vmem:[#allocation2 + $0x700] sm:$0xff]
    %v315 = vld [vmem:[#allocation2 + $0x708] sm:$0xff]
    %v316 = vld [vmem:[#allocation2 + $0x710] sm:$0xff]
    %v317 = vld [vmem:[#allocation2 + $0x718] sm:$0xff]
    %v318 = vld [vmem:[#allocation2 + $0x720] sm:$0xff]
    %v319 = vld [vmem:[#allocation2 + $0x728] sm:$0xff]
    %v320 = vld [vmem:[#allocation2 + $0x730] sm:$0xff]
    %v321 = vld [vmem:[#allocation2 + $0x738] sm:$0xff]
    %v322 = vld [vmem:[#allocation2 + $0x740] sm:$0xff]
    %v323 = vld [vmem:[#allocation2 + $0x748] sm:$0xff]
    %v324 = vld [vmem:[#allocation2 + $0x750] sm:$0xff]
    %v325 = vld [vmem:[#allocation2 + $0x758] sm:$0xff]
    %v326 = vld [vmem:[#allocation2 + $0x760] sm:$0xff]
    %v327 = vld [vmem:[#allocation2 + $0x768] sm:$0xff]
    %v328 = vld [vmem:[#allocation2 + $0x770] sm:$0xff]
    %v329 = vld [vmem:[#allocation2 + $0x778] sm:$0xff]
    %v330 = vld [vmem:[#allocation2 + $0x780] sm:$0xff]
    %v331 = vld [vmem:[#allocation2 + $0x788] sm:$0xff]
    %v332 = vld [vmem:[#allocation2 + $0x790] sm:$0xff]
    %v333 = vld [vmem:[#allocation2 + $0x798] sm:$0xff]
    %v334 = vld [vmem:[#allocation2 + $0x7a0] sm:$0xff]
    %v335 = vld [vmem:[#allocation2 + $0x7a8] sm:$0xff]
    %v336 = vld [vmem:[#allocation2 + $0x7b0] sm:$0xff]
    %v337 = vld [vmem:[#allocation2 + $0x7b8] sm:$0xff]
    %v338 = vld [vmem:[#allocation2 + $0x7c0] sm:$0xff]
    %v339 = vld [vmem:[#allocation2 + $0x7c8] sm:$0xff]
    %v340 = vld [vmem:[#allocation2 + $0x7d0] sm:$0xff]
    %v341 = vld [vmem:[#allocation2 + $0x7d8] sm:$0xff]
    %v342 = vld [vmem:[#allocation2 + $0x7e0] sm:$0xff]
    %v343 = vld [vmem:[#allocation2 + $0x7e8] sm:$0xff]
    %v344 = vld [vmem:[#allocation2 + $0x7f0] sm:$0xff]
    %v345 = vld [vmem:[#allocation2 + $0x7f8] sm:$0xff]
    %v346 = vld [vmem:[#allocation2 + $0x800] sm:$0xff]
    %v347 = vld [vmem:[#allocation2 + $0x808] sm:$0xff]
    %v348 = vld [vmem:[#allocation2 + $0x810] sm:$0xff]
    %v349 = vld [vmem:[#allocation2 + $0x818] sm:$0xff]
    %v350 = vld [vmem:[#allocation2 + $0x820] sm:$0xff]
    %v351 = vld [vmem:[#allocation2 + $0x828] sm:$0xff]
    %v352 = vld [vmem:[#allocation2 + $0x830] sm:$0xff]
    %v353 = vld [vmem:[#allocation2 + $0x838] sm:$0xff]
    %v354 = vld [vmem:[#allocation2 + $0x840] sm:$0xff]
    %v355 = vld [vmem:[#allocation2 + $0x848] sm:$0xff]
    %v356 = vld [vmem:[#allocation2 + $0x850] sm:$0xff]
    %v357 = vld [vmem:[#allocation2 + $0x858] sm:$0xff]
    %v358 = vld [vmem:[#allocation2 + $0x860] sm:$0xff]
    %v359 = vld [vmem:[#allocation2 + $0x868] sm:$0xff]
    %v360 = vld [vmem:[#allocation2 + $0x870] sm:$0xff]
    %v361 = vld [vmem:[#allocation2 + $0x878] sm:$0xff]
    %v362 = vld [vmem:[#allocation2 + $0x880] sm:$0xff]
    %v363 = vld [vmem:[#allocation2 + $0x888] sm:$0xff]
    %v364 = vld [vmem:[#allocation2 + $0x890] sm:$0xff]
    %v365 = vld [vmem:[#allocation2 + $0x898] sm:$0xff]
    %v366 = vld [vmem:[#allocation2 + $0x8a0] sm:$0xff]
    %v367 = vld [vmem:[#allocation2 + $0x8a8] sm:$0xff]
    %v368 = vld [vmem:[#allocation2 + $0x8b0] sm:$0xff]
    %v369 = vld [vmem:[#allocation2 + $0x8b8] sm:$0xff]
    %v370 = vld [vmem:[#allocation2 + $0x8c0] sm:$0xff]
    %v371 = vld [vmem:[#allocation2 + $0x8c8] sm:$0xff]
    %v372 = vld [vmem:[#allocation2 + $0x8d0] sm:$0xff]
    %v373 = vld [vmem:[#allocation2 + $0x8d8] sm:$0xff]
    %v374 = vld [vmem:[#allocation2 + $0x8e0] sm:$0xff]
    %v375 = vld [vmem:[#allocation2 + $0x8e8] sm:$0xff]
    %v376 = vld [vmem:[#allocation2 + $0x8f0] sm:$0xff]
    %v377 = vld [vmem:[#allocation2 + $0x8f8] sm:$0xff]
    %v378 = vld [vmem:[#allocation2 + $0x900] sm:$0xff]
    %v379 = vld [vmem:[#allocation2 + $0x908] sm:$0xff]
    %v380 = vld [vmem:[#allocation2 + $0x910] sm:$0xff]
    %v381 = vld [vmem:[#allocation2 + $0x918] sm:$0xff]
    %v382 = vld [vmem:[#allocation2 + $0x920] sm:$0xff]
    %v383 = vld [vmem:[#allocation2 + $0x928] sm:$0xff]
    %v384 = vld [vmem:[#allocation4] sm:$0x1]
    %v386 = vlaneseq
    %v387 = vshrl.u32 %v386, 7
    %v388 = vsub.s32 0, %v387
    %v389 = vrot.slane %v384, %v388
    %vm391 = vcmask 392192
    %v393 = vsel %vm391, %v89, 0
    %395 = vmatprep.subr.mxu0 0.0
    %396 = vmatpush1.msra.mxu0 %v90
    %397 = vmatprep.subr.mxu0 0.0
    %398 = vmatpush1.msra.mxu0 %v91
    %399 = vmatprep.subr.mxu0 0.0
    %400 = vmatpush1.msra.mxu0 %v92
    %401 = vmatprep.subr.mxu0 0.0
    %402 = vmatpush1.msra.mxu0 %v93
    %403 = vmatprep.subr.mxu0 0.0
    %404 = vmatpush1.msra.mxu0 %v94
    %405 = vmatprep.subr.mxu0 0.0
    %406 = vmatpush1.msra.mxu0 %v95
    %407 = vmatprep.subr.mxu0 0.0
    %408 = vmatpush1.msra.mxu0 %v96
    %409 = vmatprep.subr.mxu0 0.0
    %410 = vmatpush1.msra.mxu0 %v97
    %411 = vmatprep.subr.mxu0 0.0
    %412 = vmatpush1.msra.mxu0 %v98
    %413 = vmatprep.subr.mxu0 0.0
    %414 = vmatpush1.msra.mxu0 %v99
    %415 = vmatprep.subr.mxu0 0.0
    %416 = vmatpush1.msra.mxu0 %v100
    %417 = vmatprep.subr.mxu0 0.0
    %418 = vmatpush1.msra.mxu0 %v101
    %419 = vmatprep.subr.mxu0 0.0
    %420 = vmatpush1.msra.mxu0 %v102
    %421 = vmatprep.subr.mxu0 0.0
    %422 = vmatpush1.msra.mxu0 %v103
    %423 = vmatprep.subr.mxu0 0.0
    %424 = vmatpush1.msra.mxu0 %v104
    %425 = vmatprep.subr.mxu0 0.0
    %426 = vmatpush1.msra.mxu0 %v105
    %427 = vmatprep.subr.mxu0 0.0
    %428 = vmatpush1.msra.mxu0 %v106
    %429 = vmatprep.subr.mxu0 0.0
    %430 = vmatpush1.msra.mxu0 %v107
    %431 = vmatprep.subr.mxu0 0.0
    %432 = vmatpush1.msra.mxu0 %v108
    %433 = vmatprep.subr.mxu0 0.0
    %434 = vmatpush1.msra.mxu0 %v109
    %435 = vmatprep.subr.mxu0 0.0
    %436 = vmatpush1.msra.mxu0 %v110
    %437 = vmatprep.subr.mxu0 0.0
    %438 = vmatpush1.msra.mxu0 %v111
    %439 = vmatprep.subr.mxu0 0.0
    %440 = vmatpush1.msra.mxu0 %v112
    %441 = vmatprep.subr.mxu0 0.0
    %442 = vmatpush1.msra.mxu0 %v113
    %443 = vmatprep.subr.mxu0 0.0
    %444 = vmatpush1.msra.mxu0 %v114
    %445 = vmatprep.subr.mxu0 0.0
    %446 = vmatpush1.msra.mxu0 %v115
    %447 = vmatprep.subr.mxu0 0.0
    %448 = vmatpush1.msra.mxu0 %v116
    %449 = vmatprep.subr.mxu0 0.0
    %450 = vmatpush1.msra.mxu0 %v117
    %451 = vmatprep.subr.mxu0 0.0
    %452 = vmatpush1.msra.mxu0 %v118
    %453 = vmatprep.subr.mxu0 0.0
    %454 = vmatpush1.msra.mxu0 %v119
    %455 = vmatprep.subr.mxu0 0.0
    %456 = vmatpush1.msra.mxu0 %v120
    %457 = vmatprep.subr.mxu0 0.0
    %458 = vmatpush1.msra.mxu0 %v121
    %459 = vmatprep.mubr.f32.mxu0 %v72
    %460 = vmatmul.mubr.f32.gmra.mrb[0].mxu0 %v71
    %v461 = vpop.f32.mrb[0].mxu0
    %v462 = vadd.f32 %v389, %v461
    %v463 = vpop.f32.mrb[0].mxu0
    %464 = vdwg.mxu0
    %465 = vmatprep.subr.mxu0 0.0
    %466 = vmatpush1.msra.mxu0 %v122
    %467 = vmatprep.subr.mxu0 0.0
    %468 = vmatpush1.msra.mxu0 %v123
    %469 = vmatprep.subr.mxu0 0.0
    %470 = vmatpush1.msra.mxu0 %v124
    %471 = vmatprep.subr.mxu0 0.0
    %472 = vmatpush1.msra.mxu0 %v125
    %473 = vmatprep.subr.mxu0 0.0
    %474 = vmatpush1.msra.mxu0 %v126
    %475 = vmatprep.subr.mxu0 0.0
    %476 = vmatpush1.msra.mxu0 %v127
    %477 = vmatprep.subr.mxu0 0.0
    %478 = vmatpush1.msra.mxu0 %v128
    %479 = vmatprep.subr.mxu0 0.0
    %480 = vmatpush1.msra.mxu0 %v129
    %481 = vmatprep.subr.mxu0 0.0
    %482 = vmatpush1.msra.mxu0 %v130
    %483 = vmatprep.subr.mxu0 0.0
    %484 = vmatpush1.msra.mxu0 %v131
    %485 = vmatprep.subr.mxu0 0.0
    %486 = vmatpush1.msra.mxu0 %v132
    %487 = vmatprep.subr.mxu0 0.0
    %488 = vmatpush1.msra.mxu0 %v133
    %489 = vmatprep.subr.mxu0 0.0
    %490 = vmatpush1.msra.mxu0 %v134
    %491 = vmatprep.subr.mxu0 0.0
    %492 = vmatpush1.msra.mxu0 %v135
    %493 = vmatprep.subr.mxu0 0.0
    %494 = vmatpush1.msra.mxu0 %v136
    %495 = vmatprep.subr.mxu0 0.0
    %496 = vmatpush1.msra.mxu0 %v137
    %497 = vmatprep.subr.mxu0 0.0
    %498 = vmatpush1.msra.mxu0 %v138
    %499 = vmatprep.subr.mxu0 0.0
    %500 = vmatpush1.msra.mxu0 %v139
    %501 = vmatprep.subr.mxu0 0.0
    %502 = vmatpush1.msra.mxu0 %v140
    %503 = vmatprep.subr.mxu0 0.0
    %504 = vmatpush1.msra.mxu0 %v141
    %505 = vmatprep.subr.mxu0 0.0
    %506 = vmatpush1.msra.mxu0 %v142
    %507 = vmatprep.subr.mxu0 0.0
    %508 = vmatpush1.msra.mxu0 %v143
    %509 = vmatprep.subr.mxu0 0.0
    %510 = vmatpush1.msra.mxu0 %v144
    %511 = vmatprep.subr.mxu0 0.0
    %512 = vmatpush1.msra.mxu0 %v145
    %513 = vmatprep.subr.mxu0 0.0
    %514 = vmatpush1.msra.mxu0 %v146
    %515 = vmatprep.subr.mxu0 0.0
    %516 = vmatpush1.msra.mxu0 %v147
    %517 = vmatprep.subr.mxu0 0.0
    %518 = vmatpush1.msra.mxu0 %v148
    %519 = vmatprep.subr.mxu0 0.0
    %520 = vmatpush1.msra.mxu0 %v149
    %521 = vmatprep.subr.mxu0 0.0
    %522 = vmatpush1.msra.mxu0 %v150
    %523 = vmatprep.subr.mxu0 0.0
    %524 = vmatpush1.msra.mxu0 %v151
    %525 = vmatprep.subr.mxu0 0.0
    %526 = vmatpush1.msra.mxu0 %v152
    %527 = vmatprep.subr.mxu0 0.0
    %528 = vmatpush1.msra.mxu0 %v153
    %529 = vmatprep.mubr.f32.mxu0 %v74
    %530 = vmatmul.mubr.f32.gmra.mrb[0].mxu0 %v73
    %v531 = vpop.f32.mrb[0].mxu0
    %v532 = vadd.f32 %v462, %v531
    %v533 = vpop.f32.mrb[0].mxu0
    %534 = vdwg.mxu0
    %535 = vmatprep.subr.mxu0 0.0
    %536 = vmatpush1.msra.mxu0 %v154
    %537 = vmatprep.subr.mxu0 0.0
    %538 = vmatpush1.msra.mxu0 %v155
    %539 = vmatprep.subr.mxu0 0.0
    %540 = vmatpush1.msra.mxu0 %v156
    %541 = vmatprep.subr.mxu0 0.0
    %542 = vmatpush1.msra.mxu0 %v157
    %543 = vmatprep.subr.mxu0 0.0
    %544 = vmatpush1.msra.mxu0 %v158
    %545 = vmatprep.subr.mxu0 0.0
    %546 = vmatpush1.msra.mxu0 %v159
    %547 = vmatprep.subr.mxu0 0.0
    %548 = vmatpush1.msra.mxu0 %v160
    %549 = vmatprep.subr.mxu0 0.0
    %550 = vmatpush1.msra.mxu0 %v161
    %551 = vmatprep.subr.mxu0 0.0
    %552 = vmatpush1.msra.mxu0 %v162
    %553 = vmatprep.subr.mxu0 0.0
    %554 = vmatpush1.msra.mxu0 %v163
    %555 = vmatprep.subr.mxu0 0.0
    %556 = vmatpush1.msra.mxu0 %v164
    %557 = vmatprep.subr.mxu0 0.0
    %558 = vmatpush1.msra.mxu0 %v165
    %559 = vmatprep.subr.mxu0 0.0
    %560 = vmatpush1.msra.mxu0 %v166
    %561 = vmatprep.subr.mxu0 0.0
    %562 = vmatpush1.msra.mxu0 %v167
    %563 = vmatprep.subr.mxu0 0.0
    %564 = vmatpush1.msra.mxu0 %v168
    %565 = vmatprep.subr.mxu0 0.0
    %566 = vmatpush1.msra.mxu0 %v169
    %567 = vmatprep.subr.mxu0 0.0
    %568 = vmatpush1.msra.mxu0 %v170
    %569 = vmatprep.subr.mxu0 0.0
    %570 = vmatpush1.msra.mxu0 %v171
    %571 = vmatprep.subr.mxu0 0.0
    %572 = vmatpush1.msra.mxu0 %v172
    %573 = vmatprep.subr.mxu0 0.0
    %574 = vmatpush1.msra.mxu0 %v173
    %575 = vmatprep.subr.mxu0 0.0
    %576 = vmatpush1.msra.mxu0 %v174
    %577 = vmatprep.subr.mxu0 0.0
    %578 = vmatpush1.msra.mxu0 %v175
    %579 = vmatprep.subr.mxu0 0.0
    %580 = vmatpush1.msra.mxu0 %v176
    %581 = vmatprep.subr.mxu0 0.0
    %582 = vmatpush1.msra.mxu0 %v177
    %583 = vmatprep.subr.mxu0 0.0
    %584 = vmatpush1.msra.mxu0 %v178
    %585 = vmatprep.subr.mxu0 0.0
    %586 = vmatpush1.msra.mxu0 %v179
    %587 = vmatprep.subr.mxu0 0.0
    %588 = vmatpush1.msra.mxu0 %v180
    %589 = vmatprep.subr.mxu0 0.0
    %590 = vmatpush1.msra.mxu0 %v181
    %591 = vmatprep.subr.mxu0 0.0
    %592 = vmatpush1.msra.mxu0 %v182
    %593 = vmatprep.subr.mxu0 0.0
    %594 = vmatpush1.msra.mxu0 %v183
    %595 = vmatprep.subr.mxu0 0.0
    %596 = vmatpush1.msra.mxu0 %v184
    %597 = vmatprep.subr.mxu0 0.0
    %598 = vmatpush1.msra.mxu0 %v185
    %599 = vmatprep.mubr.f32.mxu0 %v76
    %600 = vmatmul.mubr.f32.gmra.mrb[0].mxu0 %v75
    %v601 = vpop.f32.mrb[0].mxu0
    %v602 = vadd.f32 %v532, %v601
    %v603 = vpop.f32.mrb[0].mxu0
    %604 = vdwg.mxu0
    %605 = vmatprep.subr.mxu0 0.0
    %606 = vmatpush1.msra.mxu0 %v186
    %607 = vmatprep.subr.mxu0 0.0
    %608 = vmatpush1.msra.mxu0 %v187
    %609 = vmatprep.subr.mxu0 0.0
    %610 = vmatpush1.msra.mxu0 %v188
    %611 = vmatprep.subr.mxu0 0.0
    %612 = vmatpush1.msra.mxu0 %v189
    %613 = vmatprep.subr.mxu0 0.0
    %614 = vmatpush1.msra.mxu0 %v190
    %615 = vmatprep.subr.mxu0 0.0
    %616 = vmatpush1.msra.mxu0 %v191
    %617 = vmatprep.subr.mxu0 0.0
    %618 = vmatpush1.msra.mxu0 %v192
    %619 = vmatprep.subr.mxu0 0.0
    %620 = vmatpush1.msra.mxu0 %v193
    %621 = vmatprep.subr.mxu0 0.0
    %622 = vmatpush1.msra.mxu0 %v194
    %623 = vmatprep.subr.mxu0 0.0
    %624 = vmatpush1.msra.mxu0 %v195
    %625 = vmatprep.subr.mxu0 0.0
    %626 = vmatpush1.msra.mxu0 %v196
    %627 = vmatprep.subr.mxu0 0.0
    %628 = vmatpush1.msra.mxu0 %v197
    %629 = vmatprep.subr.mxu0 0.0
    %630 = vmatpush1.msra.mxu0 %v198
    %631 = vmatprep.subr.mxu0 0.0
    %632 = vmatpush1.msra.mxu0 %v199
    %633 = vmatprep.subr.mxu0 0.0
    %634 = vmatpush1.msra.mxu0 %v200
    %635 = vmatprep.subr.mxu0 0.0
    %636 = vmatpush1.msra.mxu0 %v201
    %637 = vmatprep.subr.mxu0 0.0
    %638 = vmatpush1.msra.mxu0 %v202
    %639 = vmatprep.subr.mxu0 0.0
    %640 = vmatpush1.msra.mxu0 %v203
    %641 = vmatprep.subr.mxu0 0.0
    %642 = vmatpush1.msra.mxu0 %v204
    %643 = vmatprep.subr.mxu0 0.0
    %644 = vmatpush1.msra.mxu0 %v205
    %645 = vmatprep.subr.mxu0 0.0
    %646 = vmatpush1.msra.mxu0 %v206
    %647 = vmatprep.subr.mxu0 0.0
    %648 = vmatpush1.msra.mxu0 %v207
    %649 = vmatprep.subr.mxu0 0.0
    %650 = vmatpush1.msra.mxu0 %v208
    %651 = vmatprep.subr.mxu0 0.0
    %652 = vmatpush1.msra.mxu0 %v209
    %653 = vmatprep.subr.mxu0 0.0
    %654 = vmatpush1.msra.mxu0 %v210
    %655 = vmatprep.subr.mxu0 0.0
    %656 = vmatpush1.msra.mxu0 %v211
    %657 = vmatprep.subr.mxu0 0.0
    %658 = vmatpush1.msra.mxu0 %v212
    %659 = vmatprep.subr.mxu0 0.0
    %660 = vmatpush1.msra.mxu0 %v213
    %661 = vmatprep.subr.mxu0 0.0
    %662 = vmatpush1.msra.mxu0 %v214
    %663 = vmatprep.subr.mxu0 0.0
    %664 = vmatpush1.msra.mxu0 %v215
    %665 = vmatprep.subr.mxu0 0.0
    %666 = vmatpush1.msra.mxu0 %v216
    %667 = vmatprep.subr.mxu0 0.0
    %668 = vmatpush1.msra.mxu0 %v217
    %669 = vmatprep.mubr.f32.mxu0 %v78
    %670 = vmatmul.mubr.f32.gmra.mrb[0].mxu0 %v77
    %v671 = vpop.f32.mrb[0].mxu0
    %v672 = vadd.f32 %v602, %v671
    %v673 = vpop.f32.mrb[0].mxu0
    %674 = vdwg.mxu0
    %675 = vmatprep.subr.mxu0 0.0
    %676 = vmatpush1.msra.mxu0 %v218
    %677 = vmatprep.subr.mxu0 0.0
    %678 = vmatpush1.msra.mxu0 %v219
    %679 = vmatprep.subr.mxu0 0.0
    %680 = vmatpush1.msra.mxu0 %v220
    %681 = vmatprep.subr.mxu0 0.0
    %682 = vmatpush1.msra.mxu0 %v221
    %683 = vmatprep.subr.mxu0 0.0
    %684 = vmatpush1.msra.mxu0 %v222
    %685 = vmatprep.subr.mxu0 0.0
    %686 = vmatpush1.msra.mxu0 %v223
    %687 = vmatprep.subr.mxu0 0.0
    %688 = vmatpush1.msra.mxu0 %v224
    %689 = vmatprep.subr.mxu0 0.0
    %690 = vmatpush1.msra.mxu0 %v225
    %691 = vmatprep.subr.mxu0 0.0
    %692 = vmatpush1.msra.mxu0 %v226
    %693 = vmatprep.subr.mxu0 0.0
    %694 = vmatpush1.msra.mxu0 %v227
    %695 = vmatprep.subr.mxu0 0.0
    %696 = vmatpush1.msra.mxu0 %v228
    %697 = vmatprep.subr.mxu0 0.0
    %698 = vmatpush1.msra.mxu0 %v229
    %699 = vmatprep.subr.mxu0 0.0
    %700 = vmatpush1.msra.mxu0 %v230
    %701 = vmatprep.subr.mxu0 0.0
    %702 = vmatpush1.msra.mxu0 %v231
    %703 = vmatprep.subr.mxu0 0.0
    %704 = vmatpush1.msra.mxu0 %v232
    %705 = vmatprep.subr.mxu0 0.0
    %706 = vmatpush1.msra.mxu0 %v233
    %707 = vmatprep.subr.mxu0 0.0
    %708 = vmatpush1.msra.mxu0 %v234
    %709 = vmatprep.subr.mxu0 0.0
    %710 = vmatpush1.msra.mxu0 %v235
    %711 = vmatprep.subr.mxu0 0.0
    %712 = vmatpush1.msra.mxu0 %v236
    %713 = vmatprep.subr.mxu0 0.0
    %714 = vmatpush1.msra.mxu0 %v237
    %715 = vmatprep.subr.mxu0 0.0
    %716 = vmatpush1.msra.mxu0 %v238
    %717 = vmatprep.subr.mxu0 0.0
    %718 = vmatpush1.msra.mxu0 %v239
    %719 = vmatprep.subr.mxu0 0.0
    %720 = vmatpush1.msra.mxu0 %v240
    %721 = vmatprep.subr.mxu0 0.0
    %722 = vmatpush1.msra.mxu0 %v241
    %723 = vmatprep.subr.mxu0 0.0
    %724 = vmatpush1.msra.mxu0 %v242
    %725 = vmatprep.subr.mxu0 0.0
    %726 = vmatpush1.msra.mxu0 %v243
    %727 = vmatprep.subr.mxu0 0.0
    %728 = vmatpush1.msra.mxu0 %v244
    %729 = vmatprep.subr.mxu0 0.0
    %730 = vmatpush1.msra.mxu0 %v245
    %731 = vmatprep.subr.mxu0 0.0
    %732 = vmatpush1.msra.mxu0 %v246
    %733 = vmatprep.subr.mxu0 0.0
    %734 = vmatpush1.msra.mxu0 %v247
    %735 = vmatprep.subr.mxu0 0.0
    %736 = vmatpush1.msra.mxu0 %v248
    %737 = vmatprep.subr.mxu0 0.0
    %738 = vmatpush1.msra.mxu0 %v249
    %739 = vmatprep.mubr.f32.mxu0 %v80
    %740 = vmatmul.mubr.f32.gmra.mrb[0].mxu0 %v79
    %v741 = vpop.f32.mrb[0].mxu0
    %v742 = vadd.f32 %v672, %v741
    %v743 = vpop.f32.mrb[0].mxu0
    %744 = vdwg.mxu0
    %745 = vmatprep.subr.mxu0 0.0
    %746 = vmatpush1.msra.mxu0 %v250
    %747 = vmatprep.subr.mxu0 0.0
    %748 = vmatpush1.msra.mxu0 %v251
    %749 = vmatprep.subr.mxu0 0.0
    %750 = vmatpush1.msra.mxu0 %v252
    %751 = vmatprep.subr.mxu0 0.0
    %752 = vmatpush1.msra.mxu0 %v253
    %753 = vmatprep.subr.mxu0 0.0
    %754 = vmatpush1.msra.mxu0 %v254
    %755 = vmatprep.subr.mxu0 0.0
    %756 = vmatpush1.msra.mxu0 %v255
    %757 = vmatprep.subr.mxu0 0.0
    %758 = vmatpush1.msra.mxu0 %v256
    %759 = vmatprep.subr.mxu0 0.0
    %760 = vmatpush1.msra.mxu0 %v257
    %761 = vmatprep.subr.mxu0 0.0
    %762 = vmatpush1.msra.mxu0 %v258
    %763 = vmatprep.subr.mxu0 0.0
    %764 = vmatpush1.msra.mxu0 %v259
    %765 = vmatprep.subr.mxu0 0.0
    %766 = vmatpush1.msra.mxu0 %v260
    %767 = vmatprep.subr.mxu0 0.0
    %768 = vmatpush1.msra.mxu0 %v261
    %769 = vmatprep.subr.mxu0 0.0
    %770 = vmatpush1.msra.mxu0 %v262
    %771 = vmatprep.subr.mxu0 0.0
    %772 = vmatpush1.msra.mxu0 %v263
    %773 = vmatprep.subr.mxu0 0.0
    %774 = vmatpush1.msra.mxu0 %v264
    %775 = vmatprep.subr.mxu0 0.0
    %776 = vmatpush1.msra.mxu0 %v265
    %777 = vmatprep.subr.mxu0 0.0
    %778 = vmatpush1.msra.mxu0 %v266
    %779 = vmatprep.subr.mxu0 0.0
    %780 = vmatpush1.msra.mxu0 %v267
    %781 = vmatprep.subr.mxu0 0.0
    %782 = vmatpush1.msra.mxu0 %v268
    %783 = vmatprep.subr.mxu0 0.0
    %784 = vmatpush1.msra.mxu0 %v269
    %785 = vmatprep.subr.mxu0 0.0
    %786 = vmatpush1.msra.mxu0 %v270
    %787 = vmatprep.subr.mxu0 0.0
    %788 = vmatpush1.msra.mxu0 %v271
    %789 = vmatprep.subr.mxu0 0.0
    %790 = vmatpush1.msra.mxu0 %v272
    %791 = vmatprep.subr.mxu0 0.0
    %792 = vmatpush1.msra.mxu0 %v273
    %793 = vmatprep.subr.mxu0 0.0
    %794 = vmatpush1.msra.mxu0 %v274
    %795 = vmatprep.subr.mxu0 0.0
    %796 = vmatpush1.msra.mxu0 %v275
    %797 = vmatprep.subr.mxu0 0.0
    %798 = vmatpush1.msra.mxu0 %v276
    %799 = vmatprep.subr.mxu0 0.0
    %800 = vmatpush1.msra.mxu0 %v277
    %801 = vmatprep.subr.mxu0 0.0
    %802 = vmatpush1.msra.mxu0 %v278
    %803 = vmatprep.subr.mxu0 0.0
    %804 = vmatpush1.msra.mxu0 %v279
    %805 = vmatprep.subr.mxu0 0.0
    %806 = vmatpush1.msra.mxu0 %v280
    %807 = vmatprep.subr.mxu0 0.0
    %808 = vmatpush1.msra.mxu0 %v281
    %809 = vmatprep.mubr.f32.mxu0 %v82
    %810 = vmatmul.mubr.f32.gmra.mrb[0].mxu0 %v81
    %v811 = vpop.f32.mrb[0].mxu0
    %v812 = vadd.f32 %v742, %v811
    %v813 = vpop.f32.mrb[0].mxu0
    %814 = vdwg.mxu0
    %815 = vmatprep.subr.mxu0 0.0
    %816 = vmatpush1.msra.mxu0 %v282
    %817 = vmatprep.subr.mxu0 0.0
    %818 = vmatpush1.msra.mxu0 %v283
    %819 = vmatprep.subr.mxu0 0.0
    %820 = vmatpush1.msra.mxu0 %v284
    %821 = vmatprep.subr.mxu0 0.0
    %822 = vmatpush1.msra.mxu0 %v285
    %823 = vmatprep.subr.mxu0 0.0
    %824 = vmatpush1.msra.mxu0 %v286
    %825 = vmatprep.subr.mxu0 0.0
    %826 = vmatpush1.msra.mxu0 %v287
    %827 = vmatprep.subr.mxu0 0.0
    %828 = vmatpush1.msra.mxu0 %v288
    %829 = vmatprep.subr.mxu0 0.0
    %830 = vmatpush1.msra.mxu0 %v289
    %831 = vmatprep.subr.mxu0 0.0
    %832 = vmatpush1.msra.mxu0 %v290
    %833 = vmatprep.subr.mxu0 0.0
    %834 = vmatpush1.msra.mxu0 %v291
    %835 = vmatprep.subr.mxu0 0.0
    %836 = vmatpush1.msra.mxu0 %v292
    %837 = vmatprep.subr.mxu0 0.0
    %838 = vmatpush1.msra.mxu0 %v293
    %839 = vmatprep.subr.mxu0 0.0
    %840 = vmatpush1.msra.mxu0 %v294
    %841 = vmatprep.subr.mxu0 0.0
    %842 = vmatpush1.msra.mxu0 %v295
    %843 = vmatprep.subr.mxu0 0.0
    %844 = vmatpush1.msra.mxu0 %v296
    %845 = vmatprep.subr.mxu0 0.0
    %846 = vmatpush1.msra.mxu0 %v297
    %847 = vmatprep.subr.mxu0 0.0
    %848 = vmatpush1.msra.mxu0 %v298
    %849 = vmatprep.subr.mxu0 0.0
    %850 = vmatpush1.msra.mxu0 %v299
    %851 = vmatprep.subr.mxu0 0.0
    %852 = vmatpush1.msra.mxu0 %v300
    %853 = vmatprep.subr.mxu0 0.0
    %854 = vmatpush1.msra.mxu0 %v301
    %855 = vmatprep.subr.mxu0 0.0
    %856 = vmatpush1.msra.mxu0 %v302
    %857 = vmatprep.subr.mxu0 0.0
    %858 = vmatpush1.msra.mxu0 %v303
    %859 = vmatprep.subr.mxu0 0.0
    %860 = vmatpush1.msra.mxu0 %v304
    %861 = vmatprep.subr.mxu0 0.0
    %862 = vmatpush1.msra.mxu0 %v305
    %863 = vmatprep.subr.mxu0 0.0
    %864 = vmatpush1.msra.mxu0 %v306
    %865 = vmatprep.subr.mxu0 0.0
    %866 = vmatpush1.msra.mxu0 %v307
    %867 = vmatprep.subr.mxu0 0.0
    %868 = vmatpush1.msra.mxu0 %v308
    %869 = vmatprep.subr.mxu0 0.0
    %870 = vmatpush1.msra.mxu0 %v309
    %871 = vmatprep.subr.mxu0 0.0
    %872 = vmatpush1.msra.mxu0 %v310
    %873 = vmatprep.subr.mxu0 0.0
    %874 = vmatpush1.msra.mxu0 %v311
    %875 = vmatprep.subr.mxu0 0.0
    %876 = vmatpush1.msra.mxu0 %v312
    %877 = vmatprep.subr.mxu0 0.0
    %878 = vmatpush1.msra.mxu0 %v313
    %879 = vmatprep.mubr.f32.mxu0 %v84
    %880 = vmatmul.mubr.f32.gmra.mrb[0].mxu0 %v83
    %v881 = vpop.f32.mrb[0].mxu0
    %v882 = vadd.f32 %v812, %v881
    %v883 = vpop.f32.mrb[0].mxu0
    %884 = vdwg.mxu0
    %885 = vmatprep.subr.mxu0 0.0
    %886 = vmatpush1.msra.mxu0 %v314
    %887 = vmatprep.subr.mxu0 0.0
    %888 = vmatpush1.msra.mxu0 %v315
    %889 = vmatprep.subr.mxu0 0.0
    %890 = vmatpush1.msra.mxu0 %v316
    %891 = vmatprep.subr.mxu0 0.0
    %892 = vmatpush1.msra.mxu0 %v317
    %893 = vmatprep.subr.mxu0 0.0
    %894 = vmatpush1.msra.mxu0 %v318
    %895 = vmatprep.subr.mxu0 0.0
    %896 = vmatpush1.msra.mxu0 %v319
    %897 = vmatprep.subr.mxu0 0.0
    %898 = vmatpush1.msra.mxu0 %v320
    %899 = vmatprep.subr.mxu0 0.0
    %900 = vmatpush1.msra.mxu0 %v321
    %901 = vmatprep.subr.mxu0 0.0
    %902 = vmatpush1.msra.mxu0 %v322
    %903 = vmatprep.subr.mxu0 0.0
    %904 = vmatpush1.msra.mxu0 %v323
    %905 = vmatprep.subr.mxu0 0.0
    %906 = vmatpush1.msra.mxu0 %v324
    %907 = vmatprep.subr.mxu0 0.0
    %908 = vmatpush1.msra.mxu0 %v325
    %909 = vmatprep.subr.mxu0 0.0
    %910 = vmatpush1.msra.mxu0 %v326
    %911 = vmatprep.subr.mxu0 0.0
    %912 = vmatpush1.msra.mxu0 %v327
    %913 = vmatprep.subr.mxu0 0.0
    %914 = vmatpush1.msra.mxu0 %v328
    %915 = vmatprep.subr.mxu0 0.0
    %916 = vmatpush1.msra.mxu0 %v329
    %917 = vmatprep.subr.mxu0 0.0
    %918 = vmatpush1.msra.mxu0 %v330
    %919 = vmatprep.subr.mxu0 0.0
    %920 = vmatpush1.msra.mxu0 %v331
    %921 = vmatprep.subr.mxu0 0.0
    %922 = vmatpush1.msra.mxu0 %v332
    %923 = vmatprep.subr.mxu0 0.0
    %924 = vmatpush1.msra.mxu0 %v333
    %925 = vmatprep.subr.mxu0 0.0
    %926 = vmatpush1.msra.mxu0 %v334
    %927 = vmatprep.subr.mxu0 0.0
    %928 = vmatpush1.msra.mxu0 %v335
    %929 = vmatprep.subr.mxu0 0.0
    %930 = vmatpush1.msra.mxu0 %v336
    %931 = vmatprep.subr.mxu0 0.0
    %932 = vmatpush1.msra.mxu0 %v337
    %933 = vmatprep.subr.mxu0 0.0
    %934 = vmatpush1.msra.mxu0 %v338
    %935 = vmatprep.subr.mxu0 0.0
    %936 = vmatpush1.msra.mxu0 %v339
    %937 = vmatprep.subr.mxu0 0.0
    %938 = vmatpush1.msra.mxu0 %v340
    %939 = vmatprep.subr.mxu0 0.0
    %940 = vmatpush1.msra.mxu0 %v341
    %941 = vmatprep.subr.mxu0 0.0
    %942 = vmatpush1.msra.mxu0 %v342
    %943 = vmatprep.subr.mxu0 0.0
    %944 = vmatpush1.msra.mxu0 %v343
    %945 = vmatprep.subr.mxu0 0.0
    %946 = vmatpush1.msra.mxu0 %v344
    %947 = vmatprep.subr.mxu0 0.0
    %948 = vmatpush1.msra.mxu0 %v345
    %949 = vmatprep.mubr.f32.mxu0 %v86
    %950 = vmatmul.mubr.f32.gmra.mrb[0].mxu0 %v85
    %v951 = vpop.f32.mrb[0].mxu0
    %v952 = vadd.f32 %v882, %v951
    %v953 = vpop.f32.mrb[0].mxu0
    %954 = vdwg.mxu0
    %955 = vmatprep.subr.mxu0 0.0
    %956 = vmatpush1.msra.mxu0 %v346
    %957 = vmatprep.subr.mxu0 0.0
    %958 = vmatpush1.msra.mxu0 %v347
    %959 = vmatprep.subr.mxu0 0.0
    %960 = vmatpush1.msra.mxu0 %v348
    %961 = vmatprep.subr.mxu0 0.0
    %962 = vmatpush1.msra.mxu0 %v349
    %963 = vmatprep.subr.mxu0 0.0
    %964 = vmatpush1.msra.mxu0 %v350
    %965 = vmatprep.subr.mxu0 0.0
    %966 = vmatpush1.msra.mxu0 %v351
    %967 = vmatprep.subr.mxu0 0.0
    %968 = vmatpush1.msra.mxu0 %v352
    %969 = vmatprep.subr.mxu0 0.0
    %970 = vmatpush1.msra.mxu0 %v353
    %971 = vmatprep.subr.mxu0 0.0
    %972 = vmatpush1.msra.mxu0 %v354
    %973 = vmatprep.subr.mxu0 0.0
    %974 = vmatpush1.msra.mxu0 %v355
    %975 = vmatprep.subr.mxu0 0.0
    %976 = vmatpush1.msra.mxu0 %v356
    %977 = vmatprep.subr.mxu0 0.0
    %978 = vmatpush1.msra.mxu0 %v357
    %979 = vmatprep.subr.mxu0 0.0
    %980 = vmatpush1.msra.mxu0 %v358
    %981 = vmatprep.subr.mxu0 0.0
    %982 = vmatpush1.msra.mxu0 %v359
    %983 = vmatprep.subr.mxu0 0.0
    %984 = vmatpush1.msra.mxu0 %v360
    %985 = vmatprep.subr.mxu0 0.0
    %986 = vmatpush1.msra.mxu0 %v361
    %987 = vmatprep.subr.mxu0 0.0
    %988 = vmatpush1.msra.mxu0 %v362
    %989 = vmatprep.subr.mxu0 0.0
    %990 = vmatpush1.msra.mxu0 %v363
    %991 = vmatprep.subr.mxu0 0.0
    %992 = vmatpush1.msra.mxu0 %v364
    %993 = vmatprep.subr.mxu0 0.0
    %994 = vmatpush1.msra.mxu0 %v365
    %995 = vmatprep.subr.mxu0 0.0
    %996 = vmatpush1.msra.mxu0 %v366
    %997 = vmatprep.subr.mxu0 0.0
    %998 = vmatpush1.msra.mxu0 %v367
    %999 = vmatprep.subr.mxu0 0.0
    %1000 = vmatpush1.msra.mxu0 %v368
    %1001 = vmatprep.subr.mxu0 0.0
    %1002 = vmatpush1.msra.mxu0 %v369
    %1003 = vmatprep.subr.mxu0 0.0
    %1004 = vmatpush1.msra.mxu0 %v370
    %1005 = vmatprep.subr.mxu0 0.0
    %1006 = vmatpush1.msra.mxu0 %v371
    %1007 = vmatprep.subr.mxu0 0.0
    %1008 = vmatpush1.msra.mxu0 %v372
    %1009 = vmatprep.subr.mxu0 0.0
    %1010 = vmatpush1.msra.mxu0 %v373
    %1011 = vmatprep.subr.mxu0 0.0
    %1012 = vmatpush1.msra.mxu0 %v374
    %1013 = vmatprep.subr.mxu0 0.0
    %1014 = vmatpush1.msra.mxu0 %v375
    %1015 = vmatprep.subr.mxu0 0.0
    %1016 = vmatpush1.msra.mxu0 %v376
    %1017 = vmatprep.subr.mxu0 0.0
    %1018 = vmatpush1.msra.mxu0 %v377
    %1019 = vmatprep.mubr.f32.mxu0 %v88
    %1020 = vmatmul.mubr.f32.gmra.mrb[0].mxu0 %v87
    %v1021 = vpop.f32.mrb[0].mxu0
    %v1022 = vadd.f32 %v952, %v1021
    %v1023 = vpop.f32.mrb[0].mxu0
    %1024 = vdwg.mxu0
    %1025 = vmatprep.subr.mxu0 0.0
    %1026 = vmatpush1.msra.mxu0 %v378
    %1027 = vmatprep.subr.mxu0 0.0
    %1028 = vmatpush1.msra.mxu0 %v379
    %1029 = vmatprep.subr.mxu0 0.0
    %1030 = vmatpush1.msra.mxu0 %v380
    %1031 = vmatprep.subr.mxu0 0.0
    %1032 = vmatpush1.msra.mxu0 %v381
    %1033 = vmatprep.subr.mxu0 0.0
    %1034 = vmatpush1.msra.mxu0 %v382
    %1035 = vmatprep.subr.mxu0 0.0
    %1036 = vmatpush1.msra.mxu0 %v383
    %1037 = vmatprep.subr.mxu0 0.0
    %1038 = vmatpush1.msra.mxu0 0.0
    %1039 = vmatprep.subr.mxu0 0.0
    %1040 = vmatpush1.msra.mxu0 0.0
    %1041 = vmatprep.subr.mxu0 0.0
    %1042 = vmatpush1.msra.mxu0 0.0
    %1043 = vmatprep.subr.mxu0 0.0
    %1044 = vmatpush1.msra.mxu0 0.0
    %1045 = vmatprep.subr.mxu0 0.0
    %1046 = vmatpush1.msra.mxu0 0.0
    %1047 = vmatprep.subr.mxu0 0.0
    %1048 = vmatpush1.msra.mxu0 0.0
    %1049 = vmatprep.subr.mxu0 0.0
    %1050 = vmatpush1.msra.mxu0 0.0
    %1051 = vmatprep.subr.mxu0 0.0
    %1052 = vmatpush1.msra.mxu0 0.0
    %1053 = vmatprep.subr.mxu0 0.0
    %1054 = vmatpush1.msra.mxu0 0.0
    %1055 = vmatprep.subr.mxu0 0.0
    %1056 = vmatpush1.msra.mxu0 0.0
    %1057 = vmatprep.subr.mxu0 0.0
    %1058 = vmatpush1.msra.mxu0 0.0
    %1059 = vmatprep.subr.mxu0 0.0
    %1060 = vmatpush1.msra.mxu0 0.0
    %1061 = vmatprep.subr.mxu0 0.0
    %1062 = vmatpush1.msra.mxu0 0.0
    %1063 = vmatprep.subr.mxu0 0.0
    %1064 = vmatpush1.msra.mxu0 0.0
    %1065 = vmatprep.subr.mxu0 0.0
    %1066 = vmatpush1.msra.mxu0 0.0
    %1067 = vmatprep.subr.mxu0 0.0
    %1068 = vmatpush1.msra.mxu0 0.0
    %1069 = vmatprep.subr.mxu0 0.0
    %1070 = vmatpush1.msra.mxu0 0.0
    %1071 = vmatprep.subr.mxu0 0.0
    %1072 = vmatpush1.msra.mxu0 0.0
    %1073 = vmatprep.subr.mxu0 0.0
    %1074 = vmatpush1.msra.mxu0 0.0
    %1075 = vmatprep.subr.mxu0 0.0
    %1076 = vmatpush1.msra.mxu0 0.0
    %1077 = vmatprep.subr.mxu0 0.0
    %1078 = vmatpush1.msra.mxu0 0.0
    %1079 = vmatprep.subr.mxu0 0.0
    %1080 = vmatpush1.msra.mxu0 0.0
    %1081 = vmatprep.subr.mxu0 0.0
    %1082 = vmatpush1.msra.mxu0 0.0
    %1083 = vmatprep.subr.mxu0 0.0
    %1084 = vmatpush1.msra.mxu0 0.0
    %1085 = vmatprep.subr.mxu0 0.0
    %1086 = vmatpush1.msra.mxu0 0.0
    %1087 = vmatprep.subr.mxu0 0.0
    %1088 = vmatpush1.msra.mxu0 0.0
    %1089 = vmatprep.mubr.f32.mxu0 0.0
    %1090 = vmatmul.mubr.f32.gmra.mrb[0].mxu0 %v393
    %v1091 = vpop.f32.mrb[0].mxu0
    %v1092 = vadd.f32 %v1022, %v1091
    %v1093 = vpop.f32.mrb[0].mxu0
    %1094 = vdwg.mxu0
    %v1095 = vld [vmem:[#allocation6] sm:$0xff]
    %v1096 = vld [vmem:[#allocation6 + $0x8] sm:$0xff]
    %v1097 = vld [vmem:[#allocation6 + $0x10] sm:$0xff]
    %v1098 = vld [vmem:[#allocation6 + $0x18] sm:$0xff]
    %v1099 = vld [vmem:[#allocation6 + $0x20] sm:$0xff]
    %v1100 = vld [vmem:[#allocation6 + $0x28] sm:$0xff]
    %v1101 = vld [vmem:[#allocation6 + $0x30] sm:$0xff]
    %v1102 = vld [vmem:[#allocation6 + $0x38] sm:$0xff]
    %v1103 = vld [vmem:[#allocation6 + $0x40] sm:$0xff]
    %v1104 = vld [vmem:[#allocation6 + $0x48] sm:$0xff]
    %v1105 = vld [vmem:[#allocation6 + $0x50] sm:$0xff]
    %v1106 = vld [vmem:[#allocation6 + $0x58] sm:$0xff]
    %v1107 = vld [vmem:[#allocation6 + $0x60] sm:$0xff]
    %v1108 = vld [vmem:[#allocation6 + $0x68] sm:$0xff]
    %v1109 = vld [vmem:[#allocation6 + $0x70] sm:$0xff]
    %v1110 = vld [vmem:[#allocation6 + $0x78] sm:$0xff]
    %v1111 = vld [vmem:[#allocation7] sm:$0x1]
    %v1113 = vlaneseq
    %v1114 = vshrl.u32 %v1113, 7
    %v1115 = vsub.s32 0, %v1114
    %v1116 = vrot.slane %v1111, %v1115
    %1118 = vmatprep.subr.mxu0 0.0
    %1119 = vmatpush1.msra.mxu0 %v1095
    %1120 = vmatprep.subr.mxu0 0.0
    %1121 = vmatpush1.msra.mxu0 %v1096
    %1122 = vmatprep.subr.mxu0 0.0
    %1123 = vmatpush1.msra.mxu0 %v1097
    %1124 = vmatprep.subr.mxu0 0.0
    %1125 = vmatpush1.msra.mxu0 %v1098
    %1126 = vmatprep.subr.mxu0 0.0
    %1127 = vmatpush1.msra.mxu0 %v1099
    %1128 = vmatprep.subr.mxu0 0.0
    %1129 = vmatpush1.msra.mxu0 %v1100
    %1130 = vmatprep.subr.mxu0 0.0
    %1131 = vmatpush1.msra.mxu0 %v1101
    %1132 = vmatprep.subr.mxu0 0.0
    %1133 = vmatpush1.msra.mxu0 %v1102
    %1134 = vmatprep.subr.mxu0 0.0
    %1135 = vmatpush1.msra.mxu0 %v1103
    %1136 = vmatprep.subr.mxu0 0.0
    %1137 = vmatpush1.msra.mxu0 %v1104
    %1138 = vmatprep.subr.mxu0 0.0
    %1139 = vmatpush1.msra.mxu0 %v1105
    %1140 = vmatprep.subr.mxu0 0.0
    %1141 = vmatpush1.msra.mxu0 %v1106
    %1142 = vmatprep.subr.mxu0 0.0
    %1143 = vmatpush1.msra.mxu0 %v1107
    %1144 = vmatprep.subr.mxu0 0.0
    %1145 = vmatpush1.msra.mxu0 %v1108
    %1146 = vmatprep.subr.mxu0 0.0
    %1147 = vmatpush1.msra.mxu0 %v1109
    %1148 = vmatprep.subr.mxu0 0.0
    %1149 = vmatpush1.msra.mxu0 %v1110
    %1150 = vmatprep.subr.mxu0 0.0
    %1151 = vmatpush1.msra.mxu0 0.0
    %1152 = vmatprep.subr.mxu0 0.0
    %1153 = vmatpush1.msra.mxu0 0.0
    %1154 = vmatprep.subr.mxu0 0.0
    %1155 = vmatpush1.msra.mxu0 0.0
    %1156 = vmatprep.subr.mxu0 0.0
    %1157 = vmatpush1.msra.mxu0 0.0
    %1158 = vmatprep.subr.mxu0 0.0
    %1159 = vmatpush1.msra.mxu0 0.0
    %1160 = vmatprep.subr.mxu0 0.0
    %1161 = vmatpush1.msra.mxu0 0.0
    %1162 = vmatprep.subr.mxu0 0.0
    %1163 = vmatpush1.msra.mxu0 0.0
    %1164 = vmatprep.subr.mxu0 0.0
    %1165 = vmatpush1.msra.mxu0 0.0
    %1166 = vmatprep.subr.mxu0 0.0
    %1167 = vmatpush1.msra.mxu0 0.0
    %1168 = vmatprep.subr.mxu0 0.0
    %1169 = vmatpush1.msra.mxu0 0.0
    %1170 = vmatprep.subr.mxu0 0.0
    %1171 = vmatpush1.msra.mxu0 0.0
    %1172 = vmatprep.subr.mxu0 0.0
    %1173 = vmatpush1.msra.mxu0 0.0
    %1174 = vmatprep.subr.mxu0 0.0
    %1175 = vmatpush1.msra.mxu0 0.0
    %1176 = vmatprep.subr.mxu0 0.0
    %1177 = vmatpush1.msra.mxu0 0.0
    %1178 = vmatprep.subr.mxu0 0.0
    %1179 = vmatpush1.msra.mxu0 0.0
    %1180 = vmatprep.subr.mxu0 0.0
    %1181 = vmatpush1.msra.mxu0 0.0
    %1182 = vmatprep.mubr.f32.mxu0 0.0
    %1183 = vmatmul.mubr.f32.gmra.mrb[0].mxu0 %v1092
    %v1184 = vpop.f32.mrb[0].mxu0
    %v1185 = vadd.f32 %v1116, %v1184
    %v1186 = vpop.f32.mrb[0].mxu0
    %1187 = vdwg.mxu0
    %1188 = vst [vmem:[%s5] sm:$0xff] %v1185
    // Predicated region
    $region38: #{mlp_forward.1} parent=1 // pred_check
      _
    $region39: #{mlp_forward.1} parent=1 // pred_check_branch
      %1190 = sbr.rel (0) target = $region41
    $region40: #{mlp_forward.1} parent=1 // pred_region
      _
    $region41: #{mlp_forward.1} parent=1 // pred_fallthru
      _
    // Predicated region
    $region42: #{mlp_forward.1} parent=1 // pred_check
      _
    $region43: #{mlp_forward.1} parent=1 // pred_check_branch
      %1192 = sbr.rel (0) target = $region45
    $region44: #{mlp_forward.1} parent=1 // pred_region
      _
    $region45: #{mlp_forward.1} parent=1 // pred_fallthru
      _
    %1193 = vsyncpa [#allocation3], 1
    %1194 = vsyncpa [#allocation5], 1
    %1195 = vsyncpa [#allocation8], 1

</llo_original>
